<compile_context>
chip_gen: v5e
topology: v5e:2x2
jax: 0.10.0
libtpu: 0.0.40
codegen_flags: <defaults>
</compile_context>

<pallas_src>
from math import floor

import jax
import jax.numpy as jnp
from jax.experimental import pallas as pl
from jax.experimental.pallas import tpu as pltpu


# ----------------------------------------------------------------------------
# Fused: per-channel normalize + (implicit zero-pad) + 4x4 avg-pool
#   pooled = A_h @ ((x * scale) + shift) @ A_w^T
# The pad region is all zeros, so cropping the pooling matrices to the valid
# H/W columns is exactly equivalent to padding first (padded pixels contribute
# zero to every pooled block while the block mean still divides by 16).
# ----------------------------------------------------------------------------
def _norm_pool_kernel(x_ref, scale_ref, shift_ref, ah_ref, awt_ref, o_ref):
    # x_ref: (1, H, W) f32; scale/shift: (1, H, 1) f32
    # ah_ref: (h4, H) f32; awt_ref: (W, w4) f32; o_ref: (1, h4, w4) f32
    norm = x_ref[0] * scale_ref[0] + shift_ref[0]                               # (H, W)
    t = jnp.dot(ah_ref[...], norm, preferred_element_type=jnp.float32)          # (h4, W)
    o_ref[0] = jnp.dot(t, awt_ref[...], preferred_element_type=jnp.float32)     # (h4, w4)


def fused_norm_pool(images, pixel_mean, pixel_std, ah, awt):
    """images: (B, C, H, W) -> pooled normalized features (B, C, h4, w4)."""
    B, C, H, W = images.shape
    h4 = ah.shape[0]
    w4 = awt.shape[1]
    x = images.reshape(B * C, H, W).astype(jnp.float32)
    inv = (1.0 / pixel_std).astype(jnp.float32)                                 # (C,)
    scale = jnp.tile(inv, B)                                                    # (B*C,)
    shift = jnp.tile(-pixel_mean.astype(jnp.float32) * inv, B)                  # (B*C,)
    # pre-broadcast along H so the in-kernel broadcast is lane-only (safe/cheap)
    scale3 = jnp.broadcast_to(scale[:, None, None], (B * C, H, 1))
    shift3 = jnp.broadcast_to(shift[:, None, None], (B * C, H, 1))
    out = pl.pallas_call(
        _norm_pool_kernel,
        out_shape=jax.ShapeDtypeStruct((B * C, h4, w4), jnp.float32),
        grid=(B * C,),
        in_specs=[pl.BlockSpec((1, H, W), lambda i: (i, 0, 0)),
                  pl.BlockSpec((1, H, 1), lambda i: (i, 0, 0)),
                  pl.BlockSpec((1, H, 1), lambda i: (i, 0, 0)),
                  pl.BlockSpec((h4, H), lambda i: (0, 0)),
                  pl.BlockSpec((W, w4), lambda i: (0, 0))],
        out_specs=pl.BlockSpec((1, h4, w4), lambda i: (i, 0, 0)),
        compiler_params=pltpu.CompilerParams(dimension_semantics=("parallel",)),
    )(x, scale3, shift3, ah.astype(jnp.float32), awt.astype(jnp.float32))
    return out.reshape(B, C, h4, w4)


# ----------------------------------------------------------------------------
# Batched channel projection (1x1 conv): (B, C, P) x (C, D) -> (B, P, D)
# (contraction on C directly, no host transpose of the pooled features)
# ----------------------------------------------------------------------------
def _channel_proj_kernel(p_ref, w_ref, o_ref):
    o_ref[0] = jax.lax.dot_general(
        p_ref[0], w_ref[...],
        dimension_numbers=(((0,), (0,)), ((), ())),
        preferred_element_type=jnp.float32)


def batched_channel_proj(pooled, w):
    B, C, P = pooled.shape
    D = w.shape[1]
    return pl.pallas_call(
        _channel_proj_kernel,
        out_shape=jax.ShapeDtypeStruct((B, P, D), jnp.float32),
        grid=(B,),
        in_specs=[pl.BlockSpec((1, C, P), lambda b: (b, 0, 0)),
                  pl.BlockSpec((C, D), lambda b: (0, 0))],
        out_specs=pl.BlockSpec((1, P, D), lambda b: (b, 0, 0)),
        compiler_params=pltpu.CompilerParams(dimension_semantics=("parallel",)),
    )(pooled.astype(jnp.float32), w.astype(jnp.float32))


# ----------------------------------------------------------------------------
# Small full-block matmul with fused bias: (M, K) @ (K, N) + bias(1, N)
# ----------------------------------------------------------------------------
def _matmul_bias_kernel(a_ref, b_ref, bias_ref, o_ref):
    o_ref[...] = (jnp.dot(a_ref[...], b_ref[...], preferred_element_type=jnp.float32)
                  + bias_ref[...])


def matmul_bias(a, b, bias):
    M, K = a.shape
    N = b.shape[1]
    return pl.pallas_call(
        _matmul_bias_kernel,
        out_shape=jax.ShapeDtypeStruct((M, N), jnp.float32),
    )(a.astype(jnp.float32), b.astype(jnp.float32),
      bias.reshape(1, N).astype(jnp.float32))


# ----------------------------------------------------------------------------
# Batched mask projection: (B, Q, D) x (B, P, D) -> (B, Q, P), contract on D
# ----------------------------------------------------------------------------
def _mask_matmul_kernel(q_ref, f_ref, o_ref):
    # contraction on D; rhs is used transposed natively by the MXU.
    o_ref[0] = jax.lax.dot_general(
        q_ref[0], f_ref[0],
        dimension_numbers=(((1,), (1,)), ((), ())),
        preferred_element_type=jnp.float32)


def batched_mask_matmul(qs, feat):
    B, Q, D = qs.shape
    _, P, _ = feat.shape
    return pl.pallas_call(
        _mask_matmul_kernel,
        out_shape=jax.ShapeDtypeStruct((B, Q, P), jnp.float32),
        grid=(B,),
        in_specs=[pl.BlockSpec((1, Q, D), lambda b: (b, 0, 0)),
                  pl.BlockSpec((1, P, D), lambda b: (b, 0, 0))],
        out_specs=pl.BlockSpec((1, Q, P), lambda b: (b, 0, 0)),
        compiler_params=pltpu.CompilerParams(dimension_semantics=("parallel",)),
    )(qs.astype(jnp.bfloat16), feat.astype(jnp.bfloat16))


# ----------------------------------------------------------------------------
# Fused (composed) bilinear resize + sigmoid, all Q masks of an image per step
# ----------------------------------------------------------------------------
def _upsample_sigmoid_kernel(m_ref, wh_ref, wwt_ref, o_ref):
    # m_ref: (1, Q, h, w) bf16; wh_ref: (OH, h) bf16; wwt_ref: (w, OW) bf16
    # o_ref: (1, Q, OH, OW) bf16
    q_tot = m_ref.shape[1]
    for q in range(q_tot):  # static unroll; Q is small (use a grid axis for large Q)
        t = jnp.dot(wh_ref[...], m_ref[0, q], preferred_element_type=jnp.float32)   # (OH, w)
        up = jnp.dot(t.astype(jnp.bfloat16), wwt_ref[...],
                     preferred_element_type=jnp.float32)                            # (OH, OW)
        o_ref[0, q] = jax.nn.sigmoid(up).astype(o_ref.dtype)    # sigmoid in f32, store bf16


def upsample_sigmoid(masks, wh, wwt):
    """masks: (Bg, Q, h, w) -> sigmoid(wh @ m @ wwt): (Bg, Q, OH, OW) bf16."""
    Bg, Q, h, w = masks.shape
    OH = wh.shape[0]
    OW = wwt.shape[1]
    return pl.pallas_call(
        _upsample_sigmoid_kernel,
        out_shape=jax.ShapeDtypeStruct((Bg, Q, OH, OW), jnp.bfloat16),
        grid=(Bg,),
        in_specs=[pl.BlockSpec((1, Q, h, w), lambda b: (b, 0, 0, 0)),
                  pl.BlockSpec((OH, h), lambda b: (0, 0)),
                  pl.BlockSpec((w, OW), lambda b: (0, 0))],
        out_specs=pl.BlockSpec((1, Q, OH, OW), lambda b: (b, 0, 0, 0)),
        compiler_params=pltpu.CompilerParams(dimension_semantics=("parallel",)),
    )(masks.astype(jnp.bfloat16), wh.astype(jnp.bfloat16), wwt.astype(jnp.bfloat16))


# ----------------------------------------------------------------------------
# Batched semantic inference: softmax(cls)[:, :-1] contracted with masks (MXU)
# ----------------------------------------------------------------------------
def _semantic_inference_kernel(cls_ref, m_ref, o_ref):
    # cls_ref: (1, Q, K+1) f32; m_ref: (1, Q, P) bf16; o_ref: (1, K+1, P) f32
    cls = cls_ref[0]
    cls = cls - jnp.max(cls, axis=-1, keepdims=True)
    e = jnp.exp(cls)
    probs = e * pl.reciprocal(jnp.sum(e, axis=-1, keepdims=True), approx=True)
    # zero the "no-object" column instead of slicing (keeps layout dense);
    # the extra output row is dropped outside the kernel.
    col = jax.lax.broadcasted_iota(jnp.int32, probs.shape, 1)
    probs = jnp.where(col < probs.shape[1] - 1, probs, 0.0)
    # einsum('qk,qp->kp') without an explicit transpose.
    o_ref[0] = jax.lax.dot_general(
        probs.astype(jnp.bfloat16), m_ref[0],
        dimension_numbers=(((0,), (0,)), ((), ())),
        preferred_element_type=jnp.float32)


def batched_semantic_inference(mask_cls, masks_flat):
    """mask_cls: (Bg, Q, K+1); masks_flat: (Bg, Q, P) -> (Bg, K+1, P) f32."""
    Bg, Q, Kp = mask_cls.shape
    _, _, P = masks_flat.shape
    return pl.pallas_call(
        _semantic_inference_kernel,
        out_shape=jax.ShapeDtypeStruct((Bg, Kp, P), jnp.float32),
        grid=(Bg,),
        in_specs=[pl.BlockSpec((1, Q, Kp), lambda b: (b, 0, 0)),
                  pl.BlockSpec((1, Q, P), lambda b: (b, 0, 0))],
        out_specs=pl.BlockSpec((1, Kp, P), lambda b: (b, 0, 0)),
        compiler_params=pltpu.CompilerParams(dimension_semantics=("parallel",)),
    )(mask_cls.astype(jnp.float32), masks_flat.astype(jnp.bfloat16))


# ----------------------------------------------------------------------------
# Host-side weight construction (all linear -> exact composition)
# ----------------------------------------------------------------------------
def _bilinear_weight_matrix(out_size, in_size):
    """Row-stochastic (out, in) matrix == torch bilinear, align_corners=False."""
    scale = in_size / out_size
    i = jnp.arange(out_size, dtype=jnp.float32)
    src = jnp.maximum((i + 0.5) * scale - 0.5, 0.0)
    i0 = jnp.clip(jnp.floor(src).astype(jnp.int32), 0, in_size - 1)
    i1 = jnp.clip(i0 + 1, 0, in_size - 1)
    w1 = src - i0.astype(jnp.float32)
    w0 = 1.0 - w1
    return (jax.nn.one_hot(i0, in_size, dtype=jnp.float32) * w0[:, None]
            + jax.nn.one_hot(i1, in_size, dtype=jnp.float32) * w1[:, None])


def _composed_resize_weights(in_size, pad_size, img_size, out_size):
    """Compose: resize(in->pad), crop to img, resize(img->out) into one (out, in)."""
    w_up = _bilinear_weight_matrix(pad_size, in_size)      # (pad, in)
    w_out = _bilinear_weight_matrix(out_size, img_size)    # (out, img)
    return w_out @ w_up[:img_size, :]                      # (out, in)


def _avg_pool_matrix(out_size, in_size, stride):
    """(out, in) matrix: row o has weight 1/stride on inputs [o*stride, o*stride+stride)."""
    o = jnp.arange(out_size)
    idx = o[:, None] * stride + jnp.arange(stride)[None, :]           # (out, stride)
    m = jax.nn.one_hot(idx, in_size, dtype=jnp.float32).sum(axis=1)
    return m / stride


# ----------------------------------------------------------------------------
# MaskFormer (inference-only, semantic path) with a synthetic Pallas head
# ----------------------------------------------------------------------------
class MaskFormerPallas:
    def __init__(self, *, num_queries=8, num_classes=16, hidden_dim=32,
                 size_divisibility=8,
                 pixel_mean=(123.675, 116.28, 103.53),
                 pixel_std=(58.395, 57.12, 57.375),
                 seed=0):
        self.num_queries = num_queries
        self.num_classes = num_classes
        self.hidden_dim = hidden_dim
        self.size_divisibility = size_divisibility
        self.sem_seg_postprocess_before_inference = True
        self.semantic_on = True
        self.pixel_mean = jnp.asarray(pixel_mean, jnp.float32)
        self.pixel_std = jnp.asarray(pixel_std, jnp.float32)

        # Deterministic synthetic "backbone + sem_seg_head" parameters.
        key = jax.random.PRNGKey(seed)
        k1, k2, k3, k4 = jax.random.split(key, 4)
        C = len(pixel_mean)
        self.w_pix = 0.02 * jax.random.normal(k1, (C, hidden_dim), jnp.float32)
        self.query_embed = 0.02 * jax.random.normal(k2, (num_queries, hidden_dim), jnp.float32)
        self.w_cls = 0.02 * jax.random.normal(k3, (hidden_dim, num_classes + 1), jnp.float32)
        self.b_cls = 0.02 * jax.random.normal(k4, (num_classes + 1,), jnp.float32)

    # ------- synthetic backbone + sem_seg_head (matmuls run in Pallas) -------
    def _sem_seg_head(self, images, max_h, max_w):
        B, C, H, W = images.shape
        stride = 4
        h4, w4 = max_h // stride, max_w // stride
        P = h4 * w4
        # Fused normalize + implicit zero-pad + 4x4 avg-pool (padded image never
        # materialized; the cropped pooling matrices account for the zero pad).
        ah = _avg_pool_matrix(h4, max_h, stride)[:, :H]        # (h4, H)
        awt = _avg_pool_matrix(w4, max_w, stride)[:, :W].T     # (W, w4)
        pooled = fused_norm_pool(images, self.pixel_mean, self.pixel_std, ah, awt)
        pooled = pooled.reshape(B, C, P)                       # contiguous reshape (free)
        # 1x1 conv == channel contraction, directly from the (B, C, P) layout.
        feat = batched_channel_proj(pooled, self.w_pix)        # (B, P, D)
        # per-image query state
        img_ctx = feat.mean(axis=1)                            # (B, D)  (tiny, host glue)
        qs = self.query_embed[None, :, :] + img_ctx[:, None, :]  # (B, Q, D)
        # class logits with fused bias add
        logits = matmul_bias(qs.reshape(B * self.num_queries, self.hidden_dim),
                             self.w_cls, self.b_cls)
        logits = logits.reshape(B, self.num_queries, self.num_classes + 1)
        # mask logits for all images in ONE batched kernel: (B, Q, D) x (B, P, D)
        pred_masks = batched_mask_matmul(qs, feat).reshape(B, self.num_queries, h4, w4)
        return {"pred_logits": logits, "pred_masks": pred_masks}

    # ----------------------------- forward ----------------------------------
    def __call__(self, batched_inputs):
        def _to_closest_stride(value, stride):
            return floor((value + stride - 1) / stride) * stride

        images = [jnp.asarray(x["image"], jnp.float32) for x in batched_inputs]
        assert all(img.shape == images[0].shape for img in images)
        images_stack = jnp.stack(images, axis=0)                       # (B, C, H, W)

        h, w = images[0].shape[-2:]
        max_h = _to_closest_stride(h, self.size_divisibility)
        max_w = _to_closest_stride(w, self.size_divisibility)

        outputs = self._sem_seg_head(images_stack, max_h, max_w)
        mask_cls_results = outputs["pred_logits"]                      # (B, Q, K+1)
        mask_pred_results = outputs["pred_masks"]                      # (B, Q, h4, w4)
        B, Q, h4, w4 = mask_pred_results.shape
        K = self.num_classes

        # Group images by requested output size so each group is ONE batched
        # kernel chain (no per-image pallas_call launches).
        groups = {}
        for b, x in enumerate(batched_inputs):
            groups.setdefault((int(x["height"]), int(x["width"])), []).append(b)

        # TODO(synk): sem_seg_postprocess_before_inference=False ordering branch
        # (class-mix first, resize after) is not implemented; default path only.
        processed_results = [dict() for _ in batched_inputs]
        for (out_h, out_w), idxs in groups.items():
            # Compose: upsample(h4->max_h), crop to (h,w), resize to (out_h,out_w)
            # into a single separable weight pair (exact; all steps are linear).
            wh = _composed_resize_weights(h4, max_h, h, out_h)          # (out_h, h4)
            ww = _composed_resize_weights(w4, max_w, w, out_w)          # (out_w, w4)
            idx = jnp.asarray(idxs, jnp.int32)
            masks_g = jnp.take(mask_pred_results, idx, axis=0)          # (Bg, Q, h4, w4)
            cls_g = jnp.take(mask_cls_results, idx, axis=0)             # (Bg, Q, K+1)
            Bg = len(idxs)

            # fused composed-bilinear + sigmoid over all Q masks, per-image grid
            sig = upsample_sigmoid(masks_g, wh, ww.T)                   # (Bg, Q, OH, OW)
            # lane-dense class mixing on flattened pixels (MXU)
            sem = batched_semantic_inference(
                cls_g, sig.reshape(Bg, Q, out_h * out_w))               # (Bg, K+1, P)
            sem = sem[:, :K, :].reshape(Bg, K, out_h, out_w)

            if self.semantic_on:
                for j, b in enumerate(idxs):
                    processed_results[b]["sem_seg"] = sem[j]
        return processed_results


# ----------------------------------------------------------------------------
if __name__ == "__main__":
    key = jax.random.PRNGKey(0)
    B, C, H, W = 2, 3, 14, 14
    OUT_H, OUT_W = 24, 24
    imgs = jax.random.uniform(key, (B, C, H, W), jnp.float32, 0.0, 255.0)
    batched_inputs = [
        {"image": imgs[i], "height": OUT_H, "width": OUT_W} for i in range(B)
    ]

    model = MaskFormerPallas(num_queries=8, num_classes=16, hidden_dim=32,
                             size_divisibility=8, seed=0)
    results = model(batched_inputs)

    for r in results:
        sem = jax.block_until_ready(r["sem_seg"])
        assert sem.shape == (model.num_classes, OUT_H, OUT_W), sem.shape
        assert bool(jnp.all(jnp.isfinite(sem)))
    print("KERNEL_OK")
</pallas_src>

<mosaic_0001>
module attributes {stable_mosaic.version = 11 : i64} {
  func.func @_norm_pool_kernel(%arg0: i32, %arg1: memref<1x14x14xf32, #tpu.memory_space<vmem>>, %arg2: memref<1x14x1xf32, #tpu.memory_space<vmem>>, %arg3: memref<1x14x1xf32, #tpu.memory_space<vmem>>, %arg4: memref<4x14xf32, #tpu.memory_space<vmem>>, %arg5: memref<14x4xf32, #tpu.memory_space<vmem>>, %arg6: memref<1x4x4xf32, #tpu.memory_space<vmem>>) attributes {dimension_semantics = [#tpu.dimension_semantics<parallel>], iteration_bounds = array<i64: 6>, scalar_prefetch = 0 : i64, scratch_operands = 0 : i64, tpu.core_type = #tpu.core_type<tc>, window_params = [{transform_indices = @transform_0, window_bounds = array<i64: 1, 14, 14>}, {transform_indices = @transform_1, window_bounds = array<i64: 1, 14, 1>}, {transform_indices = @transform_2, window_bounds = array<i64: 1, 14, 1>}, {pipeline_mode = #tpu.pipeline_mode<synchronous>, transform_indices = @transform_3, window_bounds = array<i64: 4, 14>}, {pipeline_mode = #tpu.pipeline_mode<synchronous>, transform_indices = @transform_4, window_bounds = array<i64: 14, 4>}, {transform_indices = @transform_5, window_bounds = array<i64: 1, 4, 4>}]} {
    %c0 = arith.constant 0 : index
    %c0_0 = arith.constant 0 : index
    %c0_1 = arith.constant 0 : index
    %0 = vector.load %arg1[%c0, %c0_0, %c0_1] : memref<1x14x14xf32, #tpu.memory_space<vmem>>, vector<1x14x14xf32>
    %1 = vector.shape_cast %0 : vector<1x14x14xf32> to vector<14x14xf32>
    %c0_2 = arith.constant 0 : index
    %c0_3 = arith.constant 0 : index
    %c0_4 = arith.constant 0 : index
    %2 = vector.load %arg2[%c0_2, %c0_3, %c0_4] : memref<1x14x1xf32, #tpu.memory_space<vmem>>, vector<1x14x1xf32>
    %3 = vector.shape_cast %2 : vector<1x14x1xf32> to vector<14x1xf32>
    %4 = vector.broadcast %3 : vector<14x1xf32> to vector<14x14xf32>
    %5 = arith.mulf %1, %4 : vector<14x14xf32>
    %c0_5 = arith.constant 0 : index
    %c0_6 = arith.constant 0 : index
    %c0_7 = arith.constant 0 : index
    %6 = vector.load %arg3[%c0_5, %c0_6, %c0_7] : memref<1x14x1xf32, #tpu.memory_space<vmem>>, vector<1x14x1xf32>
    %7 = vector.shape_cast %6 : vector<1x14x1xf32> to vector<14x1xf32>
    %8 = vector.broadcast %7 : vector<14x1xf32> to vector<14x14xf32>
    %9 = arith.addf %5, %8 : vector<14x14xf32>
    %c0_8 = arith.constant 0 : index
    %c0_9 = arith.constant 0 : index
    %10 = vector.load %arg4[%c0_8, %c0_9] : memref<4x14xf32, #tpu.memory_space<vmem>>, vector<4x14xf32>
    %cst = arith.constant dense<0.000000e+00> : vector<4x14xf32>
    %11 = tpu.matmul %10, %9, %cst {dimension_numbers = #tpu.dot_dimension_numbers<[1], [0], [0], [1], [0, 0, 1, 1], [], []>} : vector<4x14xf32>, vector<14x14xf32>, vector<4x14xf32> -> vector<4x14xf32>
    %c0_10 = arith.constant 0 : index
    %c0_11 = arith.constant 0 : index
    %12 = vector.load %arg5[%c0_10, %c0_11] : memref<14x4xf32, #tpu.memory_space<vmem>>, vector<14x4xf32>
    %cst_12 = arith.constant dense<0.000000e+00> : vector<4x4xf32>
    %13 = tpu.matmul %11, %12, %cst_12 {dimension_numbers = #tpu.dot_dimension_numbers<[1], [0], [0], [1], [0, 0, 1, 1], [], []>} : vector<4x14xf32>, vector<14x4xf32>, vector<4x4xf32> -> vector<4x4xf32>
    %c0_13 = arith.constant 0 : index
    %c0_14 = arith.constant 0 : index
    %c0_15 = arith.constant 0 : index
    %14 = vector.load %arg6[%c0_13, %c0_14, %c0_15] : memref<1x4x4xf32, #tpu.memory_space<vmem>>, vector<1x4x4xf32>
    %15 = vector.shape_cast %14 : vector<1x4x4xf32> to vector<4x4xf32>
    %16 = vector.shape_cast %13 : vector<4x4xf32> to vector<1x4x4xf32>
    tpu.vector_store %arg6[%c0_13, %c0_14, %c0_15], %16 {strides = array<i32>} : memref<1x4x4xf32, #tpu.memory_space<vmem>>, vector<1x4x4xf32>,
    return
  }
  func.func @transform_0(%arg0: i32) -> (i32, i32, i32) {
    %c0_i32 = arith.constant 0 : i32
    %c0_i32_0 = arith.constant 0 : i32
    %c0_i32_1 = arith.constant 0 : i32
    return %arg0, %c0_i32, %c0_i32_0 : i32, i32, i32
  }
  func.func @transform_1(%arg0: i32) -> (i32, i32, i32) {
    %c0_i32 = arith.constant 0 : i32
    %c0_i32_0 = arith.constant 0 : i32
    %c0_i32_1 = arith.constant 0 : i32
    return %arg0, %c0_i32, %c0_i32_0 : i32, i32, i32
  }
  func.func @transform_2(%arg0: i32) -> (i32, i32, i32) {
    %c0_i32 = arith.constant 0 : i32
    %c0_i32_0 = arith.constant 0 : i32
    %c0_i32_1 = arith.constant 0 : i32
    return %arg0, %c0_i32, %c0_i32_0 : i32, i32, i32
  }
  func.func @transform_3(%arg0: i32) -> (i32, i32) {
    %c0_i32 = arith.constant 0 : i32
    %c0_i32_0 = arith.constant 0 : i32
    %c0_i32_1 = arith.constant 0 : i32
    return %c0_i32, %c0_i32_0 : i32, i32
  }
  func.func @transform_4(%arg0: i32) -> (i32, i32) {
    %c0_i32 = arith.constant 0 : i32
    %c0_i32_0 = arith.constant 0 : i32
    %c0_i32_1 = arith.constant 0 : i32
    return %c0_i32, %c0_i32_0 : i32, i32
  }
  func.func @transform_5(%arg0: i32) -> (i32, i32, i32) {
    %c0_i32 = arith.constant 0 : i32
    %c0_i32_0 = arith.constant 0 : i32
    %c0_i32_1 = arith.constant 0 : i32
    return %arg0, %c0_i32, %c0_i32_0 : i32, i32, i32
  }
}

</mosaic_0001>

<llo_original>
// kernel: tpu_custom_call.1
$region0: #{tpu_custom_call.1}
  #allocation0 [shape = 'u32[]', space=smem, size = 0x4, offset = 0x4, fixed_abs, tag = 'smem constant byte address 0x4 - core index']
  #allocation1 [shape = 'u32[72,128]{1,0:T(1,128)}', space=vmem, size = 0x9000, scoped, tag = 'internal scratch']
  %s0 = inlined_call_operand.vmem [shape: f32[6,14,14], index: 0, kind: input, shape index: {}]
  %s1 = inlined_call_operand.vmem [shape: f32[6,14,1], index: 1, kind: input, shape index: {}]
  %s2 = inlined_call_operand.vmem [shape: f32[6,14,1], index: 2, kind: input, shape index: {}]
  %s3 = inlined_call_operand.vmem [shape: f32[4,14], index: 3, kind: input, shape index: {}]
  %s4 = inlined_call_operand.vmem [shape: f32[14,4], index: 4, kind: input, shape index: {}]
  %s5 = inlined_call_operand.vmem [shape: f32[6,4,4], index: 5, kind: output, shape index: {}]
  %s6 = sld [smem:[#allocation0]]
  $region53: #{tpu_custom_call.1} parent=0
    _
  %s8 = ssub.s32 1, %s6
  %s9 = scalar_select 0, %s8, %s6
  loop: start=0, step=1, limit=8
  $region2: #{tpu_custom_call.1} parent=0 // loop_pre_header
    _
  $region3: #{tpu_custom_call.1} parent=0 // loop_header
    %s11 = sphi 0, %s15
    %p12 = scmp.ge.s32.totalorder %s11, 8
    %s21 = sphi 0, %s23
    %s24 = sphi 0, %s21
    %s25 = sphi 0, %s24
    %s41 = sphi 0, %s25
    %s47 = sphi 0, %s49
    %s50 = sphi 0, %s47
    %s51 = sphi 0, %s50
    %s67 = sphi 0, %s51
    %s73 = sphi 0, %s75
    %s76 = sphi 0, %s73
    %s77 = sphi 0, %s76
    %s93 = sphi 0, %s77
    %s97 = sphi 0, %s97
    %s99 = sphi 0, %s97
    %s100 = sphi 0, %s99
    %s114 = sphi 0, %s100
    %s118 = sphi 0, %s118
    %s120 = sphi 0, %s118
    %s121 = sphi 0, %s120
    %s135 = sphi 0, %s121
    %s141 = sphi 0, %s143
    %s144 = sphi 0, %s141
    %s145 = sphi 0, %s144
    %s161 = sphi 0, %s145
  $region4: #{tpu_custom_call.1} parent=0 // loop_header_branch
    %14 = sbr.rel (%p12) target = $region8
  $region5: #{tpu_custom_call.1} parent=0 // loop_body
    %s16 = ssub.s32 %s11, 1
    %s17 = ssub.s32 %s11, 2
    %s18 = sadd.s32 %s11, 1
    %s19 = ssub.s32 %s11, %s18
    %p20 = scmp.eq.s32.totalorder %s19, 0
    %s22 = sadd.s32 %s21, 1
    %s23 = scalar_select %p20, %s21, %s22
    %p26 = pneg %p20
    %p27 = scmp.eq.s32.totalorder %s11, 5
    %p28 = por %p26, %p27
    %p29 = scmp.ne.s32.totalorder %s21, %s24
    %p30 = scmp.eq.s32.totalorder %s11, 0
    %p31 = por %p29, %p30
    %p32 = scmp.ne.s32.totalorder %s21, %s24
    %p33 = scmp.eq.s32.totalorder %s16, 5
    %p34 = por %p32, %p33
    %p35 = scmp.ne.s32.totalorder %s24, %s25
    %p36 = scmp.eq.s32.totalorder %s16, 0
    %p37 = por %p35, %p36
    %p38 = scmp.ne.s32.totalorder %s24, %s25
    %p39 = scmp.eq.s32.totalorder %s17, 5
    %p40 = por %p38, %p39
    %p42 = scmp.ne.s32.totalorder %s25, %s41
    %p43 = scmp.eq.s32.totalorder %s17, 0
    %p44 = por %p42, %p43
    %s45 = ssub.s32 %s11, %s18
    %p46 = scmp.eq.s32.totalorder %s45, 0
    %s48 = sadd.s32 %s47, 1
    %s49 = scalar_select %p46, %s47, %s48
    %p52 = pneg %p46
    %p53 = scmp.eq.s32.totalorder %s11, 5
    %p54 = por %p52, %p53
    %p55 = scmp.ne.s32.totalorder %s47, %s50
    %p56 = scmp.eq.s32.totalorder %s11, 0
    %p57 = por %p55, %p56
    %p58 = scmp.ne.s32.totalorder %s47, %s50
    %p59 = scmp.eq.s32.totalorder %s16, 5
    %p60 = por %p58, %p59
    %p61 = scmp.ne.s32.totalorder %s50, %s51
    %p62 = scmp.eq.s32.totalorder %s16, 0
    %p63 = por %p61, %p62
    %p64 = scmp.ne.s32.totalorder %s50, %s51
    %p65 = scmp.eq.s32.totalorder %s17, 5
    %p66 = por %p64, %p65
    %p68 = scmp.ne.s32.totalorder %s51, %s67
    %p69 = scmp.eq.s32.totalorder %s17, 0
    %p70 = por %p68, %p69
    %s71 = ssub.s32 %s11, %s18
    %p72 = scmp.eq.s32.totalorder %s71, 0
    %s74 = sadd.s32 %s73, 1
    %s75 = scalar_select %p72, %s73, %s74
    %p78 = pneg %p72
    %p79 = scmp.eq.s32.totalorder %s11, 5
    %p80 = por %p78, %p79
    %p81 = scmp.ne.s32.totalorder %s73, %s76
    %p82 = scmp.eq.s32.totalorder %s11, 0
    %p83 = por %p81, %p82
    %p84 = scmp.ne.s32.totalorder %s73, %s76
    %p85 = scmp.eq.s32.totalorder %s16, 5
    %p86 = por %p84, %p85
    %p87 = scmp.ne.s32.totalorder %s76, %s77
    %p88 = scmp.eq.s32.totalorder %s16, 0
    %p89 = por %p87, %p88
    %p90 = scmp.ne.s32.totalorder %s76, %s77
    %p91 = scmp.eq.s32.totalorder %s17, 5
    %p92 = por %p90, %p91
    %p94 = scmp.ne.s32.totalorder %s77, %s93
    %p95 = scmp.eq.s32.totalorder %s17, 0
    %p96 = por %p94, %p95
    %s98 = sadd.s32 %s97, 1
    %p101 = scmp.eq.s32.totalorder %s11, 5
    %p102 = scmp.ne.s32.totalorder %s97, %s99
    %p103 = scmp.eq.s32.totalorder %s11, 0
    %p104 = por %p102, %p103
    %p105 = scmp.ne.s32.totalorder %s97, %s99
    %p106 = scmp.eq.s32.totalorder %s16, 5
    %p107 = por %p105, %p106
    %p108 = scmp.ne.s32.totalorder %s99, %s100
    %p109 = scmp.eq.s32.totalorder %s16, 0
    %p110 = por %p108, %p109
    %p111 = scmp.ne.s32.totalorder %s99, %s100
    %p112 = scmp.eq.s32.totalorder %s17, 5
    %p113 = por %p111, %p112
    %p115 = scmp.ne.s32.totalorder %s100, %s114
    %p116 = scmp.eq.s32.totalorder %s17, 0
    %p117 = por %p115, %p116
    %s119 = sadd.s32 %s118, 1
    %p122 = scmp.eq.s32.totalorder %s11, 5
    %p123 = scmp.ne.s32.totalorder %s118, %s120
    %p124 = scmp.eq.s32.totalorder %s11, 0
    %p125 = por %p123, %p124
    %p126 = scmp.ne.s32.totalorder %s118, %s120
    %p127 = scmp.eq.s32.totalorder %s16, 5
    %p128 = por %p126, %p127
    %p129 = scmp.ne.s32.totalorder %s120, %s121
    %p130 = scmp.eq.s32.totalorder %s16, 0
    %p131 = por %p129, %p130
    %p132 = scmp.ne.s32.totalorder %s120, %s121
    %p133 = scmp.eq.s32.totalorder %s17, 5
    %p134 = por %p132, %p133
    %p136 = scmp.ne.s32.totalorder %s121, %s135
    %p137 = scmp.eq.s32.totalorder %s17, 0
    %p138 = por %p136, %p137
    %s139 = ssub.s32 %s11, %s18
    %p140 = scmp.eq.s32.totalorder %s139, 0
    %s142 = sadd.s32 %s141, 1
    %s143 = scalar_select %p140, %s141, %s142
    %p146 = pneg %p140
    %p147 = scmp.eq.s32.totalorder %s11, 5
    %p148 = por %p146, %p147
    %p149 = scmp.ne.s32.totalorder %s141, %s144
    %p150 = scmp.eq.s32.totalorder %s11, 0
    %p151 = por %p149, %p150
    %p152 = scmp.ne.s32.totalorder %s141, %s144
    %p153 = scmp.eq.s32.totalorder %s16, 5
    %p154 = por %p152, %p153
    %p155 = scmp.ne.s32.totalorder %s144, %s145
    %p156 = scmp.eq.s32.totalorder %s16, 0
    %p157 = por %p155, %p156
    %p158 = scmp.ne.s32.totalorder %s144, %s145
    %p159 = scmp.eq.s32.totalorder %s17, 5
    %p160 = por %p158, %p159
    %p162 = scmp.ne.s32.totalorder %s145, %s161
    %p163 = scmp.eq.s32.totalorder %s17, 0
    %p164 = por %p162, %p163
    %p165 = scmp.le.s32.totalorder 1, %s11
    %p166 = scmp.lt.s32.totalorder %s11, 7
    %p167 = pnand %p165, %p166
    %p168 = pneg %p167
    // Predicated region
    $region9: #{tpu_custom_call.1} parent=5 // pred_check
      _
    $region10: #{tpu_custom_call.1} parent=5 // pred_check_branch
      %170 = sbr.rel (%p167) target = $region12
    $region11: #{tpu_custom_call.1} parent=5 // pred_region
      %s171 = ssub.s32 %s11, 1
      // Predicated region
      $region13: #{tpu_custom_call.1} parent=11 // pred_check
        %p172 = pneg %p110
      $region14: #{tpu_custom_call.1} parent=11 // pred_check_branch
        %174 = sbr.rel (%p172) target = $region16
      $region15: #{tpu_custom_call.1} parent=11 // pred_region
        _
      $region16: #{tpu_custom_call.1} parent=11 // pred_fallthru
        _
      // Predicated region
      $region17: #{tpu_custom_call.1} parent=11 // pred_check
        %p175 = pneg %p131
      $region18: #{tpu_custom_call.1} parent=11 // pred_check_branch
        %177 = sbr.rel (%p175) target = $region20
      $region19: #{tpu_custom_call.1} parent=11 // pred_region
        _
      $region20: #{tpu_custom_call.1} parent=11 // pred_fallthru
        _
    $region12: #{tpu_custom_call.1} parent=5 // pred_fallthru
      _
    %p178 = scmp.lt.s32.totalorder %s11, 6
    // Predicated region
    $region21: #{tpu_custom_call.1} parent=5 // pred_check
      %p179 = pneg %p178
    $region22: #{tpu_custom_call.1} parent=5 // pred_check_branch
      %181 = sbr.rel (%p179) target = $region24
    $region23: #{tpu_custom_call.1} parent=5 // pred_region
      // Predicated region
      $region25: #{tpu_custom_call.1} parent=23 // pred_check
        %p182 = pneg %p31
      $region26: #{tpu_custom_call.1} parent=23 // pred_check_branch
        %184 = sbr.rel (%p182) target = $region28
      $region27: #{tpu_custom_call.1} parent=23 // pred_region
        %p185 = scmp.lt.s32.totalorder %s11, 5
        %s186 = scalar_select %p185, %s11, 5
        %s187 = smul.addr %s186, 2
        %s188 = smul.addr %s187, 8
        %s189 = scalar_lea.vmem %s0, %s188
      $region28: #{tpu_custom_call.1} parent=23 // pred_fallthru
        _
      // Predicated region
      $region29: #{tpu_custom_call.1} parent=23 // pred_check
        %p190 = pneg %p57
      $region30: #{tpu_custom_call.1} parent=23 // pred_check_branch
        %192 = sbr.rel (%p190) target = $region32
      $region31: #{tpu_custom_call.1} parent=23 // pred_region
        %p193 = scmp.lt.s32.totalorder %s11, 5
        %s194 = scalar_select %p193, %s11, 5
        %s195 = smul.addr %s194, 2
        %s196 = smul.addr %s195, 8
        %s197 = scalar_lea.vmem %s1, %s196
      $region32: #{tpu_custom_call.1} parent=23 // pred_fallthru
        _
      // Predicated region
      $region33: #{tpu_custom_call.1} parent=23 // pred_check
        %p198 = pneg %p83
      $region34: #{tpu_custom_call.1} parent=23 // pred_check_branch
        %200 = sbr.rel (%p198) target = $region36
      $region35: #{tpu_custom_call.1} parent=23 // pred_region
        %p201 = scmp.lt.s32.totalorder %s11, 5
        %s202 = scalar_select %p201, %s11, 5
        %s203 = smul.addr %s202, 2
        %s204 = smul.addr %s203, 8
        %s205 = scalar_lea.vmem %s2, %s204
      $region36: #{tpu_custom_call.1} parent=23 // pred_fallthru
        _
    $region24: #{tpu_custom_call.1} parent=5 // pred_fallthru
      _
    %p206 = scmp.le.s32.totalorder 1, %s11
    %p207 = scmp.lt.s32.totalorder %s11, 7
    %p208 = pnand %p206, %p207
    %p209 = pneg %p208
    // Predicated region
    $region37: #{tpu_custom_call.1} parent=5 // pred_check
      _
    $region38: #{tpu_custom_call.1} parent=5 // pred_check_branch
      %211 = sbr.rel (%p208) target = $region40
    $region39: #{tpu_custom_call.1} parent=5 // pred_region
      %s212 = ssub.s32 %s11, 1
      %p213 = scmp.lt.s32.totalorder %s16, 5
      %s214 = scalar_select %p213, %s16, 5
      %s215 = smul.addr %s214, 2
      %s216 = smul.addr %s215, 8
      %s217 = scalar_lea.vmem %s0, %s216
      %p218 = pneg %p37
      %p219 = pneg %p34
      %p220 = scmp.lt.s32.totalorder %s16, 5
      %s221 = scalar_select %p220, %s16, 5
      %s222 = smul.addr %s221, 2
      %s223 = smul.addr %s222, 8
      %s224 = scalar_lea.vmem %s1, %s223
      %p225 = pneg %p63
      %p226 = pneg %p60
      %p227 = scmp.lt.s32.totalorder %s16, 5
      %s228 = scalar_select %p227, %s16, 5
      %s229 = smul.addr %s228, 2
      %s230 = smul.addr %s229, 8
      %s231 = scalar_lea.vmem %s2, %s230
      %p232 = pneg %p89
      %p233 = pneg %p86
      %p234 = pneg %p110
      %p235 = pneg %p107
      %p236 = pneg %p131
      %p237 = pneg %p128
      %p238 = pneg %p157
      %p239 = pneg %p154
      %p240 = scmp.lt.s32.totalorder %s16, 5
      %s241 = scalar_select %p240, %s16, 5
      %s242 = smul.addr %s241, 4
      %s243 = scalar_lea.vmem %s5, %s242
      %p244 = scmp.lt.s32.totalorder %s16, 5
      %s245 = scalar_select %p244, %s16, 5
      %s246 = smul.addr %s245, 2
      %s247 = smul.addr %s246, 8
      %s248 = scalar_lea.vmem %s0, %s247
      %p249 = scmp.lt.s32.totalorder %s16, 5
      %s250 = scalar_select %p249, %s16, 5
      %s251 = smul.addr %s250, 2
      %s252 = smul.addr %s251, 8
      %s253 = scalar_lea.vmem %s1, %s252
      %p254 = scmp.lt.s32.totalorder %s16, 5
      %s255 = scalar_select %p254, %s16, 5
      %s256 = smul.addr %s255, 2
      %s257 = smul.addr %s256, 8
      %s258 = scalar_lea.vmem %s2, %s257
      %p259 = scmp.lt.s32.totalorder %s16, 5
      %s260 = scalar_select %p259, %s16, 5
      %s261 = smul.addr %s260, 4
      %s262 = scalar_lea.vmem %s5, %s261
      %v263 = vld [vmem:[%s248] sm:$0xff]
      %v264 = vld [vmem:[%s248 + $0x8] sm:$0x3f]
      %v265 = vld [vmem:[%s253] sm:$0xff]
      %v266 = vld [vmem:[%s253 + $0x8] sm:$0x3f]
      %268 = vset.pattern.permute.xlu0 0
      %269 = vperm.xlu0 %268, %v265
      %v270 = vpop.permute.xlu0 %269
      %273 = vset.pattern.permute.xlu0 0
      %274 = vperm.xlu0 %273, %v266
      %v275 = vpop.permute.xlu0 %274
      %v277 = vmul.f32 %v263, %v270
      %v278 = vmul.f32 %v264, %v275
      %v279 = vld [vmem:[%s258] sm:$0xff]
      %v280 = vld [vmem:[%s258 + $0x8] sm:$0x3f]
      %282 = vset.pattern.permute.xlu0 0
      %283 = vperm.xlu0 %282, %v279
      %v284 = vpop.permute.xlu0 %283
      %287 = vset.pattern.permute.xlu0 0
      %288 = vperm.xlu0 %287, %v280
      %v289 = vpop.permute.xlu0 %288
      %v291 = vadd.f32 %v277, %v284
      %v292 = vadd.f32 %v278, %v289
      %v293 = vld [vmem:[%s3] sm:$0xf]
      %vm294 = vcmask 113664
      %v296 = vsel %vm294, %v293, 0
      %vm298 = vcmask 1045504
      %v300 = vsel %vm298, %v292, 0
      %302 = vmatpush.msra.mxu0 0.0
      %303 = vmatpush.msra.mxu0 0.0
      %304 = vmatpush.msra.mxu0 0.0
      %305 = vmatpush.msra.mxu0 0.0
      %306 = vmatpush.msra.mxu0 0.0
      %307 = vmatpush.msra.mxu0 0.0
      %308 = vmatpush.msra.mxu0 0.0
      %309 = vmatpush.msra.mxu0 0.0
      %310 = vmatpush.msra.mxu0 0.0
      %311 = vmatpush.msra.mxu0 0.0
      %312 = vmatpush.msra.mxu0 0.0
      %313 = vmatpush.msra.mxu0 0.0
      %314 = vmatpush.msra.mxu0 0.0
      %315 = vmatpush.msra.mxu0 0.0
      %316 = vmatpush.msra.mxu0 %v300
      %317 = vmatpush.msra.mxu0 %v291
      %318 = vmatmul.f32.gmra.mxu0 %v296
      %v319 = vpop.f32.mrf.mxu0
      %v320 = vadd.f32 0.0, %v319
      %321 = vdwg.mxu0
      %v322 = vld [vmem:[%s4] sm:$0xff]
      %v323 = vld [vmem:[%s4 + $0x8] sm:$0x3f]
      %v325 = vsel %vm294, %v320, 0
      %v328 = vsel %vm298, %v323, 0
      %330 = vmatpush.msra.mxu0 0.0
      %331 = vmatpush.msra.mxu0 0.0
      %332 = vmatpush.msra.mxu0 0.0
      %333 = vmatpush.msra.mxu0 0.0
      %334 = vmatpush.msra.mxu0 0.0
      %335 = vmatpush.msra.mxu0 0.0
      %336 = vmatpush.msra.mxu0 0.0
      %337 = vmatpush.msra.mxu0 0.0
      %338 = vmatpush.msra.mxu0 0.0
      %339 = vmatpush.msra.mxu0 0.0
      %340 = vmatpush.msra.mxu0 0.0
      %341 = vmatpush.msra.mxu0 0.0
      %342 = vmatpush.msra.mxu0 0.0
      %343 = vmatpush.msra.mxu0 0.0
      %344 = vmatpush.msra.mxu0 %v328
      %345 = vmatpush.msra.mxu0 %v322
      %346 = vmatmul.f32.gmra.mxu0 %v325
      %v347 = vpop.f32.mrf.mxu0
      %v348 = vadd.f32 0.0, %v347
      %349 = vdwg.mxu0
      %vm350 = vcmask 27648
      %351 = vst.msk [vmem:[%s262] sm:$0xf] %vm350, %v348
      %p352 = scmp.lt.s32.totalorder %s16, 5
      %s353 = scalar_select %p352, %s16, 5
      %s354 = smul.addr %s353, 4
      %s355 = scalar_lea.vmem %s5, %s354
      // Predicated region
      $region41: #{tpu_custom_call.1} parent=39 // pred_check
        %p356 = pneg %p154
      $region42: #{tpu_custom_call.1} parent=39 // pred_check_branch
        %358 = sbr.rel (%p356) target = $region44
      $region43: #{tpu_custom_call.1} parent=39 // pred_region
        _
      $region44: #{tpu_custom_call.1} parent=39 // pred_fallthru
        _
    $region40: #{tpu_custom_call.1} parent=5 // pred_fallthru
      _
    %p359 = scmp.le.s32.totalorder 2, %s11
    // Predicated region
    $region45: #{tpu_custom_call.1} parent=5 // pred_check
      %p360 = pneg %p359
    $region46: #{tpu_custom_call.1} parent=5 // pred_check_branch
      %362 = sbr.rel (%p360) target = $region48
    $region47: #{tpu_custom_call.1} parent=5 // pred_region
      %s363 = ssub.s32 %s11, 2
      // Predicated region
      $region49: #{tpu_custom_call.1} parent=47 // pred_check
        %p364 = pneg %p160
      $region50: #{tpu_custom_call.1} parent=47 // pred_check_branch
        %366 = sbr.rel (%p364) target = $region52
      $region51: #{tpu_custom_call.1} parent=47 // pred_region
        %p367 = scmp.lt.s32.totalorder %s17, 5
        %s368 = scalar_select %p367, %s17, 5
        %s369 = smul.addr %s368, 4
        %s370 = scalar_lea.vmem %s5, %s369
      $region52: #{tpu_custom_call.1} parent=47 // pred_fallthru
        _
    $region48: #{tpu_custom_call.1} parent=5 // pred_fallthru
      _
  $region6: #{tpu_custom_call.1} parent=0 // loop_footer
    %s15 = sadd.s32 1, %s11
  $region7: #{tpu_custom_call.1} parent=0 // loop_footer_branch
    %10 = sbr.rel target = $region3
  $region8: #{tpu_custom_call.1} parent=0 // loop_exit
    _

</llo_original>
